<compile_context>
chip_gen: v6e
topology: v6e:2x2x1
jax: 0.10.0
libtpu: 0.0.40
codegen_flags: <defaults>
</compile_context>

<pallas_src>
import functools

import jax
import jax.numpy as jnp
from jax.experimental import pallas as pl
from jax.experimental.pallas import tpu as pltpu

_LANE = 128
_SUBLANE = 8


def _round_up(x, m):
    return ((x + m - 1) // m) * m


def _logcosh_dice_kernel(x_ref, t_ref, inter_ref, denom_ref, *,
                         rows_valid, tile_rows, tiles_per_split, need_mask):
    c = pl.program_id(0)   # parallel (per-core) axis
    i = pl.program_id(1)   # reduction axis

    @pl.when(i == 0)
    def _():
        inter_ref[...] = jnp.zeros_like(inter_ref)
        denom_ref[...] = jnp.zeros_like(denom_ref)

    x = x_ref[...].astype(jnp.float32)
    t = t_ref[...].astype(jnp.float32)
    p = jax.nn.sigmoid(x)

    prod = p * t       # -> intersection partials
    both = p + t       # -> sum(p) + sum(t) partials (combined denominator term)

    n_sub = tile_rows // _SUBLANE

    def _accumulate(pr, bo):
        # (tile_rows, 128) -> (tile_rows/8, 8, 128): keeps (sublane, lane) =
        # (8, 128), so the axis-0 sum lowers to vreg-wise VPU adds.
        inter_ref[...] += jnp.sum(pr.reshape(n_sub, _SUBLANE, _LANE), axis=0)
        denom_ref[...] += jnp.sum(bo.reshape(n_sub, _SUBLANE, _LANE), axis=0)

    if need_mask:
        block_row0 = (c * tiles_per_split + i) * tile_rows
        ragged = block_row0 + tile_rows > rows_valid

        @pl.when(jnp.logical_not(ragged))
        def _():
            _accumulate(prod, both)

        @pl.when(ragged)
        def _():
            # Zero out rows beyond the array (BlockSpec overhang / fully-OOB
            # grid-rounding block).  Row-index compare only: no flat index, no
            # int32 overflow risk, and masking happens BEFORE accumulation so
            # undefined overhang data never enters the reduction.
            row = jax.lax.broadcasted_iota(jnp.int32, prod.shape, 0)
            keep = (block_row0 + row) < rows_valid
            _accumulate(jnp.where(keep, prod, 0.0),
                        jnp.where(keep, both, 0.0))
    else:
        _accumulate(prod, both)


def logcosh_dice_loss(inputs, targets, smooth=1.0, *, tile_rows=4096):
    """inputs/targets: any shape (e.g. NCHW) and native dtype; same element count."""
    n = inputs.size
    assert targets.size == n

    x = inputs.reshape(-1)
    t = targets.reshape(-1)

    # Pad only a ragged (<128-element) tail so the array reshapes to (rows, 128).
    # Logit pad = huge negative -> sigmoid = 0; target pad = 0 -> both partials
    # contribute exactly zero, so no lane-level masking is needed in-kernel.
    rem = n % _LANE
    if rem:
        pad = _LANE - rem
        x = jnp.pad(x, (0, pad), constant_values=-1e30)
        t = jnp.pad(t, (0, pad))

    rows = x.shape[0] // _LANE
    x2 = x.reshape(rows, _LANE)
    t2 = t.reshape(rows, _LANE)

    # Big blocks; shrink to the array for small inputs (sublane multiple of 8).
    tile_rows_eff = min(int(tile_rows), _round_up(rows, _SUBLANE))
    tile_rows_eff = _round_up(tile_rows_eff, _SUBLANE)

    total_tiles = (rows + tile_rows_eff - 1) // tile_rows_eff
    # Leading "parallel" axis: shards the row range across the 2 TensorCores on
    # v7x; a cheap sequential loop of length 2 on v5e/v6e.
    num_splits = 2 if total_tiles >= 2 else 1
    tiles_per_split = (total_tiles + num_splits - 1) // num_splits

    covered_rows = num_splits * tiles_per_split * tile_rows_eff
    need_mask = covered_rows != rows
    needs_clamp = num_splits * tiles_per_split > total_tiles
    last_block = total_tiles - 1

    def in_map(c, i):
        b = c * tiles_per_split + i
        if needs_clamp:
            # Keep the DMA in-bounds for the grid-rounding block; its data is
            # fully masked out in the kernel.
            b = jnp.minimum(b, last_block)
        return (b, 0)

    kernel = functools.partial(
        _logcosh_dice_kernel,
        rows_valid=int(rows),
        tile_rows=int(tile_rows_eff),
        tiles_per_split=int(tiles_per_split),
        need_mask=bool(need_mask),
    )

    partial_shape = jax.ShapeDtypeStruct((num_splits * _SUBLANE, _LANE),
                                         jnp.float32)

    inter_p, denom_p = pl.pallas_call(
        kernel,
        out_shape=(partial_shape, partial_shape),
        grid_spec=pltpu.PrefetchScalarGridSpec(
            num_scalar_prefetch=0,
            grid=(num_splits, tiles_per_split),
            in_specs=[
                pl.BlockSpec((tile_rows_eff, _LANE), in_map),
                pl.BlockSpec((tile_rows_eff, _LANE), in_map),
            ],
            out_specs=(
                # Per-split (8,128) partial-sum blocks; index depends only on
                # the parallel axis, so they stay resident (= the accumulators).
                pl.BlockSpec((_SUBLANE, _LANE), lambda c, i: (c, 0)),
                pl.BlockSpec((_SUBLANE, _LANE), lambda c, i: (c, 0)),
            ),
        ),
        compiler_params=pltpu.CompilerParams(
            dimension_semantics=("parallel", "arbitrary"),
        ),
    )(x2, t2)

    # Tiny scalar epilogue in plain JAX (combines the per-core partials).
    inter = jnp.sum(inter_p)
    denom = jnp.sum(denom_p)
    smooth = jnp.float32(smooth)
    dice = (2.0 * inter + smooth) / (denom + smooth)
    xv = 1.0 - dice
    return jnp.log((jnp.exp(xv) + jnp.exp(-xv)) * 0.5)


def _reference(inputs, targets, smooth=1.0):
    p = jax.nn.sigmoid(inputs.astype(jnp.float32)).reshape(-1)
    t = targets.astype(jnp.float32).reshape(-1)
    inter = jnp.sum(p * t)
    dice = (2.0 * inter + smooth) / (jnp.sum(p) + jnp.sum(t) + smooth)
    x = 1.0 - dice
    return jnp.log((jnp.exp(x) + jnp.exp(-x)) / 2.0)


if __name__ == "__main__":
    key = jax.random.PRNGKey(0)
    k1, k2 = jax.random.split(key)
    # NCHW, as in the PyTorch module's typical segmentation usage.
    inputs = jax.random.normal(k1, (2, 4, 16, 16), dtype=jnp.float32)
    targets = (jax.random.uniform(k2, (2, 4, 16, 16)) > 0.5).astype(jnp.float32)

    loss = logcosh_dice_loss(inputs, targets, smooth=1.0)
    jax.block_until_ready(loss)

    ref = _reference(inputs, targets, smooth=1.0)
    assert jnp.allclose(loss, ref, atol=1e-5, rtol=1e-5), (loss, ref)
    print("KERNEL_OK")
</pallas_src>

<mosaic_0001>
module attributes {stable_mosaic.version = 11 : i64} {
  func.func @_logcosh_dice_kernel(%arg0: i32, %arg1: i32, %arg2: memref<16x128xf32, #tpu.memory_space<vmem>>, %arg3: memref<16x128xf32, #tpu.memory_space<vmem>>, %arg4: memref<8x128xf32, #tpu.memory_space<vmem>>, %arg5: memref<8x128xf32, #tpu.memory_space<vmem>>) attributes {dimension_semantics = [#tpu.dimension_semantics<parallel>, #tpu.dimension_semantics<arbitrary>], iteration_bounds = array<i64: 1, 1>, scalar_prefetch = 0 : i64, scratch_operands = 0 : i64, tpu.core_type = #tpu.core_type<tc>, window_params = [{transform_indices = @transform_0, window_bounds = array<i64: 16, 128>}, {transform_indices = @transform_1, window_bounds = array<i64: 16, 128>}, {transform_indices = @transform_2, window_bounds = array<i64: 8, 128>}, {transform_indices = @transform_3, window_bounds = array<i64: 8, 128>}]} {
    %c0_i32 = arith.constant 0 : i32
    %0 = arith.cmpi eq, %arg1, %c0_i32 : i32
    %1 = arith.extui %0 : i1 to i32
    %c0_i32_0 = arith.constant 0 : i32
    %2 = arith.cmpi ne, %1, %c0_i32_0 : i32
    scf.if %2 {
      %cst_14 = arith.constant 0.000000e+00 : f32
      %22 = vector.broadcast %cst_14 : f32 to vector<8x128xf32>
      %c0_15 = arith.constant 0 : index
      %c0_16 = arith.constant 0 : index
      %23 = vector.load %arg4[%c0_15, %c0_16] : memref<8x128xf32, #tpu.memory_space<vmem>>, vector<8x128xf32>
      tpu.vector_store %arg4[%c0_15, %c0_16], %22 {strides = array<i32>} : memref<8x128xf32, #tpu.memory_space<vmem>>, vector<8x128xf32>,
      %cst_17 = arith.constant 0.000000e+00 : f32
      %24 = vector.broadcast %cst_17 : f32 to vector<8x128xf32>
      %c0_18 = arith.constant 0 : index
      %c0_19 = arith.constant 0 : index
      %25 = vector.load %arg5[%c0_18, %c0_19] : memref<8x128xf32, #tpu.memory_space<vmem>>, vector<8x128xf32>
      tpu.vector_store %arg5[%c0_18, %c0_19], %24 {strides = array<i32>} : memref<8x128xf32, #tpu.memory_space<vmem>>, vector<8x128xf32>,
    } else {
    }
    %c0 = arith.constant 0 : index
    %c0_1 = arith.constant 0 : index
    %3 = vector.load %arg2[%c0, %c0_1] : memref<16x128xf32, #tpu.memory_space<vmem>>, vector<16x128xf32>
    %c0_2 = arith.constant 0 : index
    %c0_3 = arith.constant 0 : index
    %4 = vector.load %arg3[%c0_2, %c0_3] : memref<16x128xf32, #tpu.memory_space<vmem>>, vector<16x128xf32>
    %5 = arith.negf %3 : vector<16x128xf32>
    %6 = math.exp %5 : vector<16x128xf32>
    %cst = arith.constant 1.000000e+00 : f32
    %7 = vector.broadcast %cst : f32 to vector<16x128xf32>
    %8 = arith.addf %7, %6 : vector<16x128xf32>
    %9 = arith.divf %7, %8 : vector<16x128xf32>
    %10 = arith.mulf %9, %4 : vector<16x128xf32>
    %11 = arith.addf %9, %4 : vector<16x128xf32>
    %c0_4 = arith.constant 0 : index
    %c0_5 = arith.constant 0 : index
    %12 = vector.load %arg4[%c0_4, %c0_5] : memref<8x128xf32, #tpu.memory_space<vmem>>, vector<8x128xf32>
    %13 = vector.shape_cast %10 : vector<16x128xf32> to vector<2x8x128xf32>
    %cst_6 = arith.constant dense<0.000000e+00> : vector<8x128xf32>
    %14 = vector.multi_reduction <add>, %13, %cst_6 [0] : vector<2x8x128xf32> to vector<8x128xf32>
    %15 = arith.addf %12, %14 : vector<8x128xf32>
    %c0_7 = arith.constant 0 : index
    %c0_8 = arith.constant 0 : index
    %16 = vector.load %arg4[%c0_7, %c0_8] : memref<8x128xf32, #tpu.memory_space<vmem>>, vector<8x128xf32>
    tpu.vector_store %arg4[%c0_7, %c0_8], %15 {strides = array<i32>} : memref<8x128xf32, #tpu.memory_space<vmem>>, vector<8x128xf32>,
    %c0_9 = arith.constant 0 : index
    %c0_10 = arith.constant 0 : index
    %17 = vector.load %arg5[%c0_9, %c0_10] : memref<8x128xf32, #tpu.memory_space<vmem>>, vector<8x128xf32>
    %18 = vector.shape_cast %11 : vector<16x128xf32> to vector<2x8x128xf32>
    %cst_11 = arith.constant dense<0.000000e+00> : vector<8x128xf32>
    %19 = vector.multi_reduction <add>, %18, %cst_11 [0] : vector<2x8x128xf32> to vector<8x128xf32>
    %20 = arith.addf %17, %19 : vector<8x128xf32>
    %c0_12 = arith.constant 0 : index
    %c0_13 = arith.constant 0 : index
    %21 = vector.load %arg5[%c0_12, %c0_13] : memref<8x128xf32, #tpu.memory_space<vmem>>, vector<8x128xf32>
    tpu.vector_store %arg5[%c0_12, %c0_13], %20 {strides = array<i32>} : memref<8x128xf32, #tpu.memory_space<vmem>>, vector<8x128xf32>,
    return
  }
  func.func @transform_0(%arg0: i32, %arg1: i32) -> (i32, i32) {
    %c1_i32 = arith.constant 1 : i32
    %0 = arith.muli %arg0, %c1_i32 : i32
    %1 = arith.addi %0, %arg1 : i32
    %c0_i32 = arith.constant 0 : i32
    %c0_i32_0 = arith.constant 0 : i32
    return %1, %c0_i32 : i32, i32
  }
  func.func @transform_1(%arg0: i32, %arg1: i32) -> (i32, i32) {
    %c1_i32 = arith.constant 1 : i32
    %0 = arith.muli %arg0, %c1_i32 : i32
    %1 = arith.addi %0, %arg1 : i32
    %c0_i32 = arith.constant 0 : i32
    %c0_i32_0 = arith.constant 0 : i32
    return %1, %c0_i32 : i32, i32
  }
  func.func @transform_2(%arg0: i32, %arg1: i32) -> (i32, i32) {
    %c0_i32 = arith.constant 0 : i32
    %c0_i32_0 = arith.constant 0 : i32
    return %arg0, %c0_i32 : i32, i32
  }
  func.func @transform_3(%arg0: i32, %arg1: i32) -> (i32, i32) {
    %c0_i32 = arith.constant 0 : i32
    %c0_i32_0 = arith.constant 0 : i32
    return %arg0, %c0_i32 : i32, i32
  }
}

</mosaic_0001>

<llo_original>
// kernel: tpu_custom_call.1
$region0: #{tpu_custom_call.1}
  #allocation0 [shape = 'u32[]', space=smem, size = 0x4, offset = 0x4, fixed_abs, tag = 'smem constant byte address 0x4 - core index']
  #allocation1 [shape = 'u32[144,128]{1,0:T(1,128)}', space=vmem, size = 0x12000, scoped, tag = 'internal scratch']
  %s0 = inlined_call_operand.hbm [shape: f32[16,128], index: 0, kind: input, shape index: {}]
  %s1 = inlined_call_operand.hbm [shape: f32[16,128], index: 1, kind: input, shape index: {}]
  %s2 = inlined_call_operand.hbm [shape: f32[8,128], index: 2, kind: output, shape index: {0}]
  %s3 = inlined_call_operand.hbm [shape: f32[8,128], index: 3, kind: output, shape index: {1}]
  %4 = xla_tuple %s2, %s3
  %s5 = sld [smem:[#allocation0]]
  $region38: #{tpu_custom_call.1} parent=0
    _
  %s7 = ssub.s32 1, %s5
  %s8 = scalar_select 0, %s7, %s5
  $region1: #{tpu_custom_call.1} parent=0
    #allocation2 [shape = 'u8[8192]{0}', space=vmem, size = 0x2000, scoped, tag = 'input window, operand 0, single buffered']
    #allocation3 [shape = 's32[1]{0}', space=sflag, size = 0x4, scoped, tag = 'scoped memory for tpu_custom_call.1']
    #allocation4 [shape = 's32[1]{0}', space=sflag, size = 0x4, scoped, tag = 'scoped memory for tpu_custom_call.1']
    #allocation5 [shape = 'u8[8192]{0}', space=vmem, size = 0x2000, scoped, tag = 'input window, operand 1, single buffered']
    #allocation6 [shape = 's32[1]{0}', space=sflag, size = 0x4, scoped, tag = 'scoped memory for tpu_custom_call.1']
    #allocation7 [shape = 'u8[4096]{0}', space=vmem, size = 0x1000, scoped, tag = 'output window, operand 0, single buffered']
    #allocation8 [shape = 'u8[4096]{0}', space=vmem, size = 0x1000, scoped, tag = 'output window, operand 1, single buffered']
    #allocation9 [shape = 's32[1]{0}', space=sflag, size = 0x4, scoped, tag = 'scoped memory for tpu_custom_call.1']
    %9 = vsyncpa [#allocation3], 0
    %10 = vsyncpa [#allocation6], 0
    %11 = vsyncpa [#allocation4], 0
    %12 = vsyncpa [#allocation9], 0
    // Predicated region
    $region2: #{tpu_custom_call.1} parent=1 // pred_check
      _
    $region3: #{tpu_custom_call.1} parent=1 // pred_check_branch
      %14 = sbr.rel (0) target = $region5
    $region4: #{tpu_custom_call.1} parent=1 // pred_region
      %s15 = sadd.s32 0, 0
      %s16 = smul.u32 2, %s15
      %s18 = ssub.s32 256, 256
      %19 = vsyncadd [#allocation3], %s18
      %s20 = smul.addr %s16, 128
      %s21 = scalar_lea.hbm %s0, %s20
      %s22 = sshll.u32 [#allocation2], 4
      %s23 = int_to_ptr.vmem [resolvable:$true] %s22
      %28 = dma.hbm_to_vmem [thread:$0]  %s21, 256, %s23, [#allocation3], 128, 128, 8
    $region5: #{tpu_custom_call.1} parent=1 // pred_fallthru
      _
    // Predicated region
    $region6: #{tpu_custom_call.1} parent=1 // pred_check
      _
    $region7: #{tpu_custom_call.1} parent=1 // pred_check_branch
      %30 = sbr.rel (0) target = $region9
    $region8: #{tpu_custom_call.1} parent=1 // pred_region
      %s31 = sadd.s32 0, 0
      %s32 = smul.u32 2, %s31
      %s34 = ssub.s32 256, 256
      %35 = vsyncadd [#allocation6], %s34
      %s36 = smul.addr %s32, 128
      %s37 = scalar_lea.hbm %s1, %s36
      %s38 = sshll.u32 [#allocation5], 4
      %s39 = int_to_ptr.vmem [resolvable:$true] %s38
      %44 = dma.hbm_to_vmem [thread:$0]  %s37, 256, %s39, [#allocation6], 128, 128, 8
    $region9: #{tpu_custom_call.1} parent=1 // pred_fallthru
      _
    // Predicated region
    $region10: #{tpu_custom_call.1} parent=1 // pred_check
      _
    $region11: #{tpu_custom_call.1} parent=1 // pred_check_branch
      %46 = sbr.rel (0) target = $region13
    $region12: #{tpu_custom_call.1} parent=1 // pred_region
      %47 = dma.done [#allocation3], 256
    $region13: #{tpu_custom_call.1} parent=1 // pred_fallthru
      _
    // Predicated region
    $region14: #{tpu_custom_call.1} parent=1 // pred_check
      _
    $region15: #{tpu_custom_call.1} parent=1 // pred_check_branch
      %49 = sbr.rel (0) target = $region17
    $region16: #{tpu_custom_call.1} parent=1 // pred_region
      %50 = dma.done [#allocation6], 256
    $region17: #{tpu_custom_call.1} parent=1 // pred_fallthru
      _
    %s51 = sadd.s32 0, 0
    %s52 = smul.u32 2, %s51
    %s53 = sadd.s32 0, 0
    %s54 = smul.u32 2, %s53
    %p55 = scmp.eq.s32.totalorder 0, 0
    // Predicated region
    $region18: #{tpu_custom_call.1} parent=1 // pred_check
      %p56 = pneg %p55
    $region19: #{tpu_custom_call.1} parent=1 // pred_check_branch
      %58 = sbr.rel (%p56) target = $region21
    $region20: #{tpu_custom_call.1} parent=1 // pred_region
      %59 = vst [vmem:[#allocation7] sm:$0xff] 0.0
      %60 = vst [vmem:[#allocation8] sm:$0xff] 0.0
    $region21: #{tpu_custom_call.1} parent=1 // pred_fallthru
      _
    %v61 = vld [vmem:[#allocation2] sm:$0xff]
    %v62 = vld [vmem:[#allocation2 + $0x8] sm:$0xff]
    %v63 = vld [vmem:[#allocation5] sm:$0xff]
    %v64 = vld [vmem:[#allocation5 + $0x8] sm:$0xff]
    %v65 = vxor.u32 %v61, 2147483648
    %v66 = vxor.u32 %v62, 2147483648
    %v67 = vmul.f32 %v65, 1.442695
    %v68 = vpow.pop %v67
    %v69 = vmul.f32 %v66, 1.442695
    %v70 = vpow.pop %v69
    %v71 = vadd.f32 %v68, 1.0
    %v72 = vadd.f32 %v70, 1.0
    %v73 = vrcp.pop %v71
    %v74 = vmul.f32 1.0, %v73
    %v75 = vrcp.pop %v72
    %v76 = vmul.f32 1.0, %v75
    %v77 = vmul.f32 %v74, %v63
    %v78 = vmul.f32 %v76, %v64
    %v79 = vadd.f32 %v74, %v63
    %v80 = vadd.f32 %v76, %v64
    %v81 = vld [vmem:[#allocation7] sm:$0xff]
    %v82 = vadd.f32 %v77, %v78
    %v83 = vadd.f32 %v81, %v82
    %84 = vst [vmem:[#allocation7] sm:$0xff] %v83
    %v85 = vld [vmem:[#allocation8] sm:$0xff]
    %v86 = vadd.f32 %v79, %v80
    %v87 = vadd.f32 %v85, %v86
    %88 = vst [vmem:[#allocation8] sm:$0xff] %v87
    // Predicated region
    $region22: #{tpu_custom_call.1} parent=1 // pred_check
      _
    $region23: #{tpu_custom_call.1} parent=1 // pred_check_branch
      %90 = sbr.rel (0) target = $region25
    $region24: #{tpu_custom_call.1} parent=1 // pred_region
      %s92 = ssub.s32 128, 128
      %93 = vsyncadd [#allocation4], %s92
      %s95 = sshll.u32 [#allocation7], 4
      %s96 = int_to_ptr.vmem [resolvable:$true] %s95
      %98 = dma.vmem_to_hbm [thread:$0]  %s96, 128, %s2, [#allocation4]
    $region25: #{tpu_custom_call.1} parent=1 // pred_fallthru
      _
    // Predicated region
    $region26: #{tpu_custom_call.1} parent=1 // pred_check
      _
    $region27: #{tpu_custom_call.1} parent=1 // pred_check_branch
      %100 = sbr.rel (0) target = $region29
    $region28: #{tpu_custom_call.1} parent=1 // pred_region
      %s102 = ssub.s32 128, 128
      %103 = vsyncadd [#allocation9], %s102
      %s105 = sshll.u32 [#allocation8], 4
      %s106 = int_to_ptr.vmem [resolvable:$true] %s105
      %108 = dma.vmem_to_hbm [thread:$0]  %s106, 128, %s3, [#allocation9]
    $region29: #{tpu_custom_call.1} parent=1 // pred_fallthru
      _
    // Predicated region
    $region30: #{tpu_custom_call.1} parent=1 // pred_check
      _
    $region31: #{tpu_custom_call.1} parent=1 // pred_check_branch
      %110 = sbr.rel (0) target = $region33
    $region32: #{tpu_custom_call.1} parent=1 // pred_region
      %111 = dma.done [#allocation4], 128
    $region33: #{tpu_custom_call.1} parent=1 // pred_fallthru
      _
    // Predicated region
    $region34: #{tpu_custom_call.1} parent=1 // pred_check
      _
    $region35: #{tpu_custom_call.1} parent=1 // pred_check_branch
      %113 = sbr.rel (0) target = $region37
    $region36: #{tpu_custom_call.1} parent=1 // pred_region
      %114 = dma.done [#allocation9], 128
    $region37: #{tpu_custom_call.1} parent=1 // pred_fallthru
      _
    %115 = vsyncpa [#allocation3], 1
    %116 = vsyncpa [#allocation6], 1
    %117 = vsyncpa [#allocation4], 1
    %118 = vsyncpa [#allocation9], 1

</llo_original>
